<compile_context>
chip_gen: v7x
topology: tpu7x:2x2x1
jax: 0.10.0
libtpu: 0.0.40
codegen_flags: <defaults>
</compile_context>

<pallas_src>
import functools

import jax
import jax.numpy as jnp
from jax.experimental import pallas as pl
from jax.experimental.pallas import tpu as pltpu


# ------------------------- Pallas kernels -------------------------

def fused_conv_bn_relu_pool_kernel(x_ref, w_ref, shift_ref, out_ref, *, wq, m_out):
    """Conv2d(k3,s2,p1) + BatchNorm(eval) + ReLU + MaxPool2d(2,1) for ONE sample.

    x_ref     : (1, 4*Cin, m_in)  bf16 phase slab; row = phase*Cin + cin with
                phase = row_parity*2 + col_parity of the padded input, lane
                m = i*Wq + j on an (Hq=Hc+1, Wq=Wc+1) conv-output grid.
    w_ref     : (4, Cout, 4*Cin)  bf16 shift-group weights (BN scale folded in);
                group g is applied at lane shift {0, 1, Wq, Wq+1}[g].
    shift_ref : (Cout, 1)         f32 folded conv-bias + BN shift.
    out_ref   : (1, Cout, m_out)  bf16 pooled activations (valid where i<Hc-1,
                j<Wc-1; the wrapper crops the rest).
    """
    x = x_ref[0]                               # (4*Cin, m_in)
    m_act = m_out + wq + 1                     # conv slab width: m_out + pool halo
    # 9-tap stride-2 conv == 4 matmuls, one per (row, col) offset of the phases.
    acc = jnp.dot(w_ref[0], x[:, 0:m_act], preferred_element_type=jnp.float32)
    acc += jnp.dot(w_ref[1], x[:, 1:m_act + 1], preferred_element_type=jnp.float32)
    acc += jnp.dot(w_ref[2], x[:, wq:m_act + wq], preferred_element_type=jnp.float32)
    acc += jnp.dot(w_ref[3], x[:, wq + 1:m_act + wq + 1],
                   preferred_element_type=jnp.float32)
    act = jnp.maximum(acc + shift_ref[...], 0.0)
    # MaxPool(k=2, s=1) factored into 2 maxes / 2 unaligned slices:
    # horizontal pair first, then vertical pair.
    h = jnp.maximum(act[:, 0:m_out + wq], act[:, 1:m_out + wq + 1])
    out_ref[0] = jnp.maximum(h[:, 0:m_out], h[:, wq:m_out + wq]).astype(out_ref.dtype)
    # NOTE: lanes outside the valid (i < Hc-1, j < Wc-1) region hold values built
    # from zero-padded phases; the wrapper crops them and they are never read.


def linear_kernel(x_ref, w_ref, b_ref, o_ref):
    o_ref[...] = (jnp.dot(x_ref[...], w_ref[...],
                          preferred_element_type=jnp.float32) + b_ref[...])


# ------------------------- glue: layer wrappers -------------------------

_VMEM = pl.BlockSpec(memory_space=pltpu.MemorySpace.VMEM)


def _round_up(x, m):
    return (x + m - 1) // m * m


def _phase_slab(x_nchw, hq, wq, m_in):
    """(B, Cin, H, W) -> (B, 4*Cin, m_in) bf16 stride-2 phase (space-to-depth) slab."""
    B, Cin, _, _ = x_nchw.shape
    # cast BEFORE padding so every subsequent XLA pass runs at bf16 width
    xp = jnp.pad(x_nchw.astype(jnp.bfloat16), ((0, 0), (0, 0), (1, 1), (1, 1)))
    phases = []
    for ph in (0, 1):
        for pw in (0, 1):
            q = xp[:, :, ph::2, pw::2][:, :, :hq, :wq]
            q = jnp.pad(q, ((0, 0), (0, 0),
                            (0, hq - q.shape[2]), (0, wq - q.shape[3])))
            phases.append(q)
    slab = jnp.stack(phases, axis=1).reshape(B, 4 * Cin, hq * wq)
    return jnp.pad(slab, ((0, 0), (0, 0), (0, m_in - hq * wq)))


def conv_bn_relu_pool(x_nchw, w_groups, shift):
    """One ConvNet layer: Conv2d(k3,s2,p1) + BN(eval) + ReLU + MaxPool(k2,s1).

    x_nchw: (B, Cin, H, W);  returns (B, Cout, Hp, Wp) bf16.
    """
    B, Cin, H, W = x_nchw.shape
    Cout = w_groups.shape[1]
    Hc = (H - 1) // 2 + 1
    Wc = (W - 1) // 2 + 1
    Hq, Wq = Hc + 1, Wc + 1            # conv lane grid (+1 row/col halo for pool)
    Hp, Wp = Hc - 1, Wc - 1            # pooled output size
    m_out = _round_up(Hq * Wq, 128)                # lane-dense per-sample output
    m_in = _round_up(m_out + 2 * (Wq + 1), 128)    # conv + pool shift slack (any Wq)
    slab = _phase_slab(x_nchw, Hq, Wq, m_in)

    kernel = functools.partial(fused_conv_bn_relu_pool_kernel, wq=Wq, m_out=m_out)
    K4 = 4 * Cin
    # Grid over batch: per-sample blocks are independent (no halo between blocks),
    # BlockSpec pipelines the per-sample DMA, "parallel" maps onto both v7x TCs.
    # TODO(synk): for full-size maps with tiny B, additionally tile the lane axis
    # (blocks of whole conv rows with a +Wq+1 halo) to bound per-block VMEM on v7x.
    out = pl.pallas_call(
        kernel,
        grid=(B,),
        out_shape=jax.ShapeDtypeStruct((B, Cout, m_out), jnp.bfloat16),
        in_specs=[
            pl.BlockSpec((1, K4, m_in), lambda b: (b, 0, 0)),
            pl.BlockSpec((4, Cout, K4), lambda b: (0, 0, 0)),
            pl.BlockSpec((Cout, 1), lambda b: (0, 0)),
        ],
        out_specs=pl.BlockSpec((1, Cout, m_out), lambda b: (b, 0, 0)),
        compiler_params=pltpu.CompilerParams(dimension_semantics=("parallel",)),
    )(slab, w_groups, shift)

    # keep only valid pool positions (i < Hp, j < Wp inside each (Hq, Wq) lane map)
    # TODO(synk): this crop + the next layer's phase split are a few small XLA ops
    # between pallas calls; fusing adjacent layers would remove them at tiny shapes.
    return out[:, :, :Hq * Wq].reshape(B, Cout, Hq, Wq)[:, :, :Hp, :Wp]


def linear(x2d, w_t, b_row):
    """x2d: (B, fc_in); w_t: (fc_in, out_pad) bf16; b_row: (1, out_pad) f32."""
    B = x2d.shape[0]
    out_pad = w_t.shape[1]
    return pl.pallas_call(
        linear_kernel,
        out_shape=jax.ShapeDtypeStruct((B, out_pad), jnp.float32),
        in_specs=[_VMEM, _VMEM, _VMEM],
        out_specs=_VMEM,
    )(x2d.astype(jnp.bfloat16), w_t, b_row)


# ------------------------- ConvNet / Conv_SVCCA -------------------------

def init_convnet(key, fc_in, out_dim, eps=1e-5):
    ks = jax.random.split(key, 10)

    def conv_layer(kw_, kb_, kg_, kbt_, cin):
        w_pt = 0.3 * jax.random.normal(kw_, (3, cin, 3, 3), jnp.float32)
        conv_b = 0.1 * jax.random.normal(kb_, (3,), jnp.float32)
        gamma = 1.0 + 0.1 * jax.random.normal(kg_, (3,), jnp.float32)
        beta = 0.1 * jax.random.normal(kbt_, (3,), jnp.float32)
        run_mean = jnp.zeros((3,), jnp.float32)
        run_var = jnp.ones((3,), jnp.float32)
        # Fold eval-mode BN: scale goes INTO the weights, only the additive shift
        # survives in the kernel epilogue.
        scale = gamma / jnp.sqrt(run_var + eps)                   # (Cout,)
        shift = ((conv_b - run_mean) * scale + beta).reshape(3, 1)
        # Shift-group weights for the in-kernel im2col: group g = (kh//2)*2+(kw//2)
        # (lane shift {0,1,Wq,Wq+1}), row = phase*Cin + cin, phase = (kh%2)*2+(kw%2).
        wg = jnp.zeros((4, 3, 4 * cin), jnp.float32)
        for kh in range(3):
            for kw in range(3):
                g = (kh // 2) * 2 + (kw // 2)
                p = (kh % 2) * 2 + (kw % 2)
                wg = wg.at[g, :, p * cin:(p + 1) * cin].set(w_pt[:, :, kh, kw])
        wg = wg * scale[None, :, None]
        return wg.astype(jnp.bfloat16), shift

    layer1 = conv_layer(ks[0], ks[1], ks[2], ks[3], 1)
    layer2 = conv_layer(ks[4], ks[5], ks[6], ks[7], 3)
    # FC: pre-transpose, zero-pad out_dim to 128 so the kernel's output is
    # lane-dense (unmasked vst); the wrapper crops back to out_dim.
    out_pad = _round_up(out_dim, 128)
    fc_w = 0.1 * jax.random.normal(ks[8], (out_dim, fc_in), jnp.float32)
    fc_b = 0.1 * jax.random.normal(ks[9], (out_dim,), jnp.float32)
    fc_w_t = jnp.zeros((fc_in, out_pad), jnp.float32).at[:, :out_dim].set(fc_w.T)
    fc_b_row = jnp.zeros((1, out_pad), jnp.float32).at[0, :out_dim].set(fc_b)
    return {"layer1": layer1, "layer2": layer2,
            "fc_w_t": fc_w_t.astype(jnp.bfloat16), "fc_b": fc_b_row}


@functools.partial(jax.jit, static_argnames=("out_dim",))
def convnet_forward(x_nchw, params, out_dim):
    # TODO(synk): BatchNorm runs in eval (running-stats) mode; training-mode
    # cross-batch statistics are not computed in-kernel.
    out = conv_bn_relu_pool(x_nchw, *params["layer1"])     # (B, 3, H1, W1)
    out = conv_bn_relu_pool(out, *params["layer2"])         # (B, 3, H2, W2)
    B = out.shape[0]
    flat = out.reshape(B, -1)            # PyTorch per-sample (c, h, w) flatten order
    full = linear(flat, params["fc_w_t"], params["fc_b"])   # (B, 128) lane-dense
    return full[:, :out_dim]


@jax.jit
def _svd_stats(mat):
    """SVD + device-side 95%-energy cutoff (replaces the host-side idx_finder loop)."""
    u, s, _ = jnp.linalg.svd(mat, full_matrices=False)
    c = jnp.cumsum(s)
    idx = jnp.sum(c < 0.95 * c[-1]) + 1
    return u, s, idx


def conv_svcca_forward(atmat, vtmat, params1, params2, out_dim):
    # Both network forwards and both SVDs are launched before the single host sync
    # so the two independent pipelines overlap on device.
    # TODO(synk): the two nets' matching layers could share one pallas_call (leading
    # net grid axis); skipped because their spatial sizes / lane strides differ.
    output1 = convnet_forward(atmat, params1, out_dim=out_dim)
    output2 = convnet_forward(vtmat, params2, out_dim=out_dim)

    B, D = output1.shape
    o1 = output1 + jnp.eye(B, D, dtype=output1.dtype) * 0.0001
    # TODO(synk): original indexes output2.shape[2] on a 2-D tensor (IndexError) and
    # feeds output2 (not o2) to the second SVD; the evident intent is implemented.
    u1, s1, idx1_d = _svd_stats(o1)
    u2, s2, idx2_d = _svd_stats(output2)

    # One host sync: only the two scalar cutoffs cross to the host (they fix the
    # dynamic output shapes, exactly as in the PyTorch reference).
    idx1, idx2 = (int(v) for v in jax.device_get((idx1_d, idx2_d)))

    # TODO(synk): original references undefined `s` and reuses u1 for svd2; the
    # evident intent (u1/s1 and u2/s2) is implemented.
    svd1 = jnp.matmul(u1[:, :idx1], jnp.diag(s1[:idx1]))
    svd2 = jnp.matmul(u2[:, :idx2], jnp.diag(s2[:idx2]))
    return svd1, svd2


if __name__ == "__main__":
    key = jax.random.PRNGKey(0)
    k1, k2, k3, k4 = jax.random.split(key, 4)

    out_dim = 8
    atmat = jax.random.normal(k1, (2, 1, 16, 16), jnp.float32)   # cnn1 input (NCHW)
    vtmat = jax.random.normal(k2, (2, 1, 12, 12), jnp.float32)   # cnn2 input (NCHW)

    # fc_dim implied by spatial size: 16 -> 8 -> 7 -> 4 -> 3 ; 12 -> 6 -> 5 -> 3 -> 2.
    # (The original 9741 / 6303 correspond to the full-size inputs.)
    fc_dim1 = 3 * 3 * 3
    fc_dim2 = 3 * 2 * 2
    params1 = init_convnet(k3, fc_dim1, out_dim)
    params2 = init_convnet(k4, fc_dim2, out_dim)

    svd1, svd2 = conv_svcca_forward(atmat, vtmat, params1, params2, out_dim)
    jax.block_until_ready((svd1, svd2))
    print("KERNEL_OK")
</pallas_src>

<mosaic_0001>
module attributes {stable_mosaic.version = 11 : i64} {
  func.func @fused_conv_bn_relu_pool_kernel(%arg0: i32, %arg1: memref<1x4x256xbf16, #tpu.memory_space<vmem>>, %arg2: memref<4x3x4xbf16, #tpu.memory_space<vmem>>, %arg3: memref<3x1xf32, #tpu.memory_space<vmem>>, %arg4: memref<1x3x128xbf16, #tpu.memory_space<vmem>>) attributes {dimension_semantics = [#tpu.dimension_semantics<parallel>], iteration_bounds = array<i64: 2>, scalar_prefetch = 0 : i64, scratch_operands = 0 : i64, tpu.core_type = #tpu.core_type<tc>, window_params = [{transform_indices = @transform_0, window_bounds = array<i64: 1, 4, 256>}, {pipeline_mode = #tpu.pipeline_mode<synchronous>, transform_indices = @transform_1, window_bounds = array<i64: 4, 3, 4>}, {pipeline_mode = #tpu.pipeline_mode<synchronous>, transform_indices = @transform_2, window_bounds = array<i64: 3, 1>}, {transform_indices = @transform_3, window_bounds = array<i64: 1, 3, 128>}]} {
    %c0 = arith.constant 0 : index
    %c0_0 = arith.constant 0 : index
    %c0_1 = arith.constant 0 : index
    %0 = vector.load %arg1[%c0, %c0_0, %c0_1] : memref<1x4x256xbf16, #tpu.memory_space<vmem>>, vector<1x4x256xbf16>
    %1 = vector.shape_cast %0 : vector<1x4x256xbf16> to vector<4x256xbf16>
    %c0_2 = arith.constant 0 : index
    %c0_3 = arith.constant 0 : index
    %c0_4 = arith.constant 0 : index
    %2 = vector.load %arg2[%c0_2, %c0_3, %c0_4] : memref<4x3x4xbf16, #tpu.memory_space<vmem>>, vector<1x3x4xbf16>
    %3 = vector.shape_cast %2 : vector<1x3x4xbf16> to vector<3x4xbf16>
    %4 = vector.extract_strided_slice %1 {offsets = [0, 0], sizes = [4, 138], strides = [1, 1]} : vector<4x256xbf16> to vector<4x138xbf16>
    %cst = arith.constant dense<0.000000e+00> : vector<3x138xf32>
    %5 = tpu.matmul %3, %4, %cst {dimension_numbers = #tpu.dot_dimension_numbers<[1], [0], [0], [1], [0, 0, 1, 1], [], []>} : vector<3x4xbf16>, vector<4x138xbf16>, vector<3x138xf32> -> vector<3x138xf32>
    %c1 = arith.constant 1 : index
    %c0_5 = arith.constant 0 : index
    %c0_6 = arith.constant 0 : index
    %6 = vector.load %arg2[%c1, %c0_5, %c0_6] : memref<4x3x4xbf16, #tpu.memory_space<vmem>>, vector<1x3x4xbf16>
    %7 = vector.shape_cast %6 : vector<1x3x4xbf16> to vector<3x4xbf16>
    %8 = vector.extract_strided_slice %1 {offsets = [0, 1], sizes = [4, 138], strides = [1, 1]} : vector<4x256xbf16> to vector<4x138xbf16>
    %cst_7 = arith.constant dense<0.000000e+00> : vector<3x138xf32>
    %9 = tpu.matmul %7, %8, %cst_7 {dimension_numbers = #tpu.dot_dimension_numbers<[1], [0], [0], [1], [0, 0, 1, 1], [], []>} : vector<3x4xbf16>, vector<4x138xbf16>, vector<3x138xf32> -> vector<3x138xf32>
    %10 = arith.addf %5, %9 : vector<3x138xf32>
    %c2 = arith.constant 2 : index
    %c0_8 = arith.constant 0 : index
    %c0_9 = arith.constant 0 : index
    %11 = vector.load %arg2[%c2, %c0_8, %c0_9] : memref<4x3x4xbf16, #tpu.memory_space<vmem>>, vector<1x3x4xbf16>
    %12 = vector.shape_cast %11 : vector<1x3x4xbf16> to vector<3x4xbf16>
    %13 = vector.extract_strided_slice %1 {offsets = [0, 9], sizes = [4, 138], strides = [1, 1]} : vector<4x256xbf16> to vector<4x138xbf16>
    %cst_10 = arith.constant dense<0.000000e+00> : vector<3x138xf32>
    %14 = tpu.matmul %12, %13, %cst_10 {dimension_numbers = #tpu.dot_dimension_numbers<[1], [0], [0], [1], [0, 0, 1, 1], [], []>} : vector<3x4xbf16>, vector<4x138xbf16>, vector<3x138xf32> -> vector<3x138xf32>
    %15 = arith.addf %10, %14 : vector<3x138xf32>
    %c3 = arith.constant 3 : index
    %c0_11 = arith.constant 0 : index
    %c0_12 = arith.constant 0 : index
    %16 = vector.load %arg2[%c3, %c0_11, %c0_12] : memref<4x3x4xbf16, #tpu.memory_space<vmem>>, vector<1x3x4xbf16>
    %17 = vector.shape_cast %16 : vector<1x3x4xbf16> to vector<3x4xbf16>
    %18 = vector.extract_strided_slice %1 {offsets = [0, 10], sizes = [4, 138], strides = [1, 1]} : vector<4x256xbf16> to vector<4x138xbf16>
    %cst_13 = arith.constant dense<0.000000e+00> : vector<3x138xf32>
    %19 = tpu.matmul %17, %18, %cst_13 {dimension_numbers = #tpu.dot_dimension_numbers<[1], [0], [0], [1], [0, 0, 1, 1], [], []>} : vector<3x4xbf16>, vector<4x138xbf16>, vector<3x138xf32> -> vector<3x138xf32>
    %20 = arith.addf %15, %19 : vector<3x138xf32>
    %c0_14 = arith.constant 0 : index
    %c0_15 = arith.constant 0 : index
    %21 = vector.load %arg3[%c0_14, %c0_15] : memref<3x1xf32, #tpu.memory_space<vmem>>, vector<3x1xf32>
    %22 = vector.broadcast %21 : vector<3x1xf32> to vector<3x138xf32>
    %23 = arith.addf %20, %22 : vector<3x138xf32>
    %cst_16 = arith.constant 0.000000e+00 : f32
    %24 = vector.broadcast %cst_16 : f32 to vector<3x138xf32>
    %25 = arith.maximumf %23, %24 : vector<3x138xf32>
    %26 = vector.extract_strided_slice %25 {offsets = [0, 0], sizes = [3, 137], strides = [1, 1]} : vector<3x138xf32> to vector<3x137xf32>
    %27 = vector.extract_strided_slice %25 {offsets = [0, 1], sizes = [3, 137], strides = [1, 1]} : vector<3x138xf32> to vector<3x137xf32>
    %28 = arith.maximumf %26, %27 : vector<3x137xf32>
    %29 = vector.extract_strided_slice %28 {offsets = [0, 0], sizes = [3, 128], strides = [1, 1]} : vector<3x137xf32> to vector<3x128xf32>
    %30 = vector.extract_strided_slice %28 {offsets = [0, 9], sizes = [3, 128], strides = [1, 1]} : vector<3x137xf32> to vector<3x128xf32>
    %31 = arith.maximumf %29, %30 : vector<3x128xf32>
    %32 = arith.truncf %31 : vector<3x128xf32> to vector<3x128xbf16>
    %c0_17 = arith.constant 0 : index
    %c0_18 = arith.constant 0 : index
    %c0_19 = arith.constant 0 : index
    %33 = vector.load %arg4[%c0_17, %c0_18, %c0_19] : memref<1x3x128xbf16, #tpu.memory_space<vmem>>, vector<1x3x128xbf16>
    %34 = vector.shape_cast %33 : vector<1x3x128xbf16> to vector<3x128xbf16>
    %35 = vector.shape_cast %32 : vector<3x128xbf16> to vector<1x3x128xbf16>
    tpu.vector_store %arg4[%c0_17, %c0_18, %c0_19], %35 {strides = array<i32>} : memref<1x3x128xbf16, #tpu.memory_space<vmem>>, vector<1x3x128xbf16>,
    return
  }
  func.func @transform_0(%arg0: i32) -> (i32, i32, i32) {
    %c0_i32 = arith.constant 0 : i32
    %c0_i32_0 = arith.constant 0 : i32
    %c0_i32_1 = arith.constant 0 : i32
    return %arg0, %c0_i32, %c0_i32_0 : i32, i32, i32
  }
  func.func @transform_1(%arg0: i32) -> (i32, i32, i32) {
    %c0_i32 = arith.constant 0 : i32
    %c0_i32_0 = arith.constant 0 : i32
    %c0_i32_1 = arith.constant 0 : i32
    %c0_i32_2 = arith.constant 0 : i32
    return %c0_i32, %c0_i32_0, %c0_i32_1 : i32, i32, i32
  }
  func.func @transform_2(%arg0: i32) -> (i32, i32) {
    %c0_i32 = arith.constant 0 : i32
    %c0_i32_0 = arith.constant 0 : i32
    %c0_i32_1 = arith.constant 0 : i32
    return %c0_i32, %c0_i32_0 : i32, i32
  }
  func.func @transform_3(%arg0: i32) -> (i32, i32, i32) {
    %c0_i32 = arith.constant 0 : i32
    %c0_i32_0 = arith.constant 0 : i32
    %c0_i32_1 = arith.constant 0 : i32
    return %arg0, %c0_i32, %c0_i32_0 : i32, i32, i32
  }
}

module attributes {stable_mosaic.version = 11 : i64} {
  func.func @fused_conv_bn_relu_pool_kernel(%arg0: i32, %arg1: memref<1x12x256xbf16, #tpu.memory_space<vmem>>, %arg2: memref<4x3x12xbf16, #tpu.memory_space<vmem>>, %arg3: memref<3x1xf32, #tpu.memory_space<vmem>>, %arg4: memref<1x3x128xbf16, #tpu.memory_space<vmem>>) attributes {dimension_semantics = [#tpu.dimension_semantics<parallel>], iteration_bounds = array<i64: 2>, scalar_prefetch = 0 : i64, scratch_operands = 0 : i64, tpu.core_type = #tpu.core_type<tc>, window_params = [{transform_indices = @transform_0, window_bounds = array<i64: 1, 12, 256>}, {pipeline_mode = #tpu.pipeline_mode<synchronous>, transform_indices = @transform_1, window_bounds = array<i64: 4, 3, 12>}, {pipeline_mode = #tpu.pipeline_mode<synchronous>, transform_indices = @transform_2, window_bounds = array<i64: 3, 1>}, {transform_indices = @transform_3, window_bounds = array<i64: 1, 3, 128>}]} {
    %c0 = arith.constant 0 : index
    %c0_0 = arith.constant 0 : index
    %c0_1 = arith.constant 0 : index
    %0 = vector.load %arg1[%c0, %c0_0, %c0_1] : memref<1x12x256xbf16, #tpu.memory_space<vmem>>, vector<1x12x256xbf16>
    %1 = vector.shape_cast %0 : vector<1x12x256xbf16> to vector<12x256xbf16>
    %c0_2 = arith.constant 0 : index
    %c0_3 = arith.constant 0 : index
    %c0_4 = arith.constant 0 : index
    %2 = vector.load %arg2[%c0_2, %c0_3, %c0_4] : memref<4x3x12xbf16, #tpu.memory_space<vmem>>, vector<1x3x12xbf16>
    %3 = vector.shape_cast %2 : vector<1x3x12xbf16> to vector<3x12xbf16>
    %4 = vector.extract_strided_slice %1 {offsets = [0, 0], sizes = [12, 134], strides = [1, 1]} : vector<12x256xbf16> to vector<12x134xbf16>
    %cst = arith.constant dense<0.000000e+00> : vector<3x134xf32>
    %5 = tpu.matmul %3, %4, %cst {dimension_numbers = #tpu.dot_dimension_numbers<[1], [0], [0], [1], [0, 0, 1, 1], [], []>} : vector<3x12xbf16>, vector<12x134xbf16>, vector<3x134xf32> -> vector<3x134xf32>
    %c1 = arith.constant 1 : index
    %c0_5 = arith.constant 0 : index
    %c0_6 = arith.constant 0 : index
    %6 = vector.load %arg2[%c1, %c0_5, %c0_6] : memref<4x3x12xbf16, #tpu.memory_space<vmem>>, vector<1x3x12xbf16>
    %7 = vector.shape_cast %6 : vector<1x3x12xbf16> to vector<3x12xbf16>
    %8 = vector.extract_strided_slice %1 {offsets = [0, 1], sizes = [12, 134], strides = [1, 1]} : vector<12x256xbf16> to vector<12x134xbf16>
    %cst_7 = arith.constant dense<0.000000e+00> : vector<3x134xf32>
    %9 = tpu.matmul %7, %8, %cst_7 {dimension_numbers = #tpu.dot_dimension_numbers<[1], [0], [0], [1], [0, 0, 1, 1], [], []>} : vector<3x12xbf16>, vector<12x134xbf16>, vector<3x134xf32> -> vector<3x134xf32>
    %10 = arith.addf %5, %9 : vector<3x134xf32>
    %c2 = arith.constant 2 : index
    %c0_8 = arith.constant 0 : index
    %c0_9 = arith.constant 0 : index
    %11 = vector.load %arg2[%c2, %c0_8, %c0_9] : memref<4x3x12xbf16, #tpu.memory_space<vmem>>, vector<1x3x12xbf16>
    %12 = vector.shape_cast %11 : vector<1x3x12xbf16> to vector<3x12xbf16>
    %13 = vector.extract_strided_slice %1 {offsets = [0, 5], sizes = [12, 134], strides = [1, 1]} : vector<12x256xbf16> to vector<12x134xbf16>
    %cst_10 = arith.constant dense<0.000000e+00> : vector<3x134xf32>
    %14 = tpu.matmul %12, %13, %cst_10 {dimension_numbers = #tpu.dot_dimension_numbers<[1], [0], [0], [1], [0, 0, 1, 1], [], []>} : vector<3x12xbf16>, vector<12x134xbf16>, vector<3x134xf32> -> vector<3x134xf32>
    %15 = arith.addf %10, %14 : vector<3x134xf32>
    %c3 = arith.constant 3 : index
    %c0_11 = arith.constant 0 : index
    %c0_12 = arith.constant 0 : index
    %16 = vector.load %arg2[%c3, %c0_11, %c0_12] : memref<4x3x12xbf16, #tpu.memory_space<vmem>>, vector<1x3x12xbf16>
    %17 = vector.shape_cast %16 : vector<1x3x12xbf16> to vector<3x12xbf16>
    %18 = vector.extract_strided_slice %1 {offsets = [0, 6], sizes = [12, 134], strides = [1, 1]} : vector<12x256xbf16> to vector<12x134xbf16>
    %cst_13 = arith.constant dense<0.000000e+00> : vector<3x134xf32>
    %19 = tpu.matmul %17, %18, %cst_13 {dimension_numbers = #tpu.dot_dimension_numbers<[1], [0], [0], [1], [0, 0, 1, 1], [], []>} : vector<3x12xbf16>, vector<12x134xbf16>, vector<3x134xf32> -> vector<3x134xf32>
    %20 = arith.addf %15, %19 : vector<3x134xf32>
    %c0_14 = arith.constant 0 : index
    %c0_15 = arith.constant 0 : index
    %21 = vector.load %arg3[%c0_14, %c0_15] : memref<3x1xf32, #tpu.memory_space<vmem>>, vector<3x1xf32>
    %22 = vector.broadcast %21 : vector<3x1xf32> to vector<3x134xf32>
    %23 = arith.addf %20, %22 : vector<3x134xf32>
    %cst_16 = arith.constant 0.000000e+00 : f32
    %24 = vector.broadcast %cst_16 : f32 to vector<3x134xf32>
    %25 = arith.maximumf %23, %24 : vector<3x134xf32>
    %26 = vector.extract_strided_slice %25 {offsets = [0, 0], sizes = [3, 133], strides = [1, 1]} : vector<3x134xf32> to vector<3x133xf32>
    %27 = vector.extract_strided_slice %25 {offsets = [0, 1], sizes = [3, 133], strides = [1, 1]} : vector<3x134xf32> to vector<3x133xf32>
    %28 = arith.maximumf %26, %27 : vector<3x133xf32>
    %29 = vector.extract_strided_slice %28 {offsets = [0, 0], sizes = [3, 128], strides = [1, 1]} : vector<3x133xf32> to vector<3x128xf32>
    %30 = vector.extract_strided_slice %28 {offsets = [0, 5], sizes = [3, 128], strides = [1, 1]} : vector<3x133xf32> to vector<3x128xf32>
    %31 = arith.maximumf %29, %30 : vector<3x128xf32>
    %32 = arith.truncf %31 : vector<3x128xf32> to vector<3x128xbf16>
    %c0_17 = arith.constant 0 : index
    %c0_18 = arith.constant 0 : index
    %c0_19 = arith.constant 0 : index
    %33 = vector.load %arg4[%c0_17, %c0_18, %c0_19] : memref<1x3x128xbf16, #tpu.memory_space<vmem>>, vector<1x3x128xbf16>
    %34 = vector.shape_cast %33 : vector<1x3x128xbf16> to vector<3x128xbf16>
    %35 = vector.shape_cast %32 : vector<3x128xbf16> to vector<1x3x128xbf16>
    tpu.vector_store %arg4[%c0_17, %c0_18, %c0_19], %35 {strides = array<i32>} : memref<1x3x128xbf16, #tpu.memory_space<vmem>>, vector<1x3x128xbf16>,
    return
  }
  func.func @transform_0(%arg0: i32) -> (i32, i32, i32) {
    %c0_i32 = arith.constant 0 : i32
    %c0_i32_0 = arith.constant 0 : i32
    %c0_i32_1 = arith.constant 0 : i32
    return %arg0, %c0_i32, %c0_i32_0 : i32, i32, i32
  }
  func.func @transform_1(%arg0: i32) -> (i32, i32, i32) {
    %c0_i32 = arith.constant 0 : i32
    %c0_i32_0 = arith.constant 0 : i32
    %c0_i32_1 = arith.constant 0 : i32
    %c0_i32_2 = arith.constant 0 : i32
    return %c0_i32, %c0_i32_0, %c0_i32_1 : i32, i32, i32
  }
  func.func @transform_2(%arg0: i32) -> (i32, i32) {
    %c0_i32 = arith.constant 0 : i32
    %c0_i32_0 = arith.constant 0 : i32
    %c0_i32_1 = arith.constant 0 : i32
    return %c0_i32, %c0_i32_0 : i32, i32
  }
  func.func @transform_3(%arg0: i32) -> (i32, i32, i32) {
    %c0_i32 = arith.constant 0 : i32
    %c0_i32_0 = arith.constant 0 : i32
    %c0_i32_1 = arith.constant 0 : i32
    return %arg0, %c0_i32, %c0_i32_0 : i32, i32, i32
  }
}

module attributes {stable_mosaic.version = 11 : i64} {
  func.func @linear_kernel(%arg0: memref<2x27xbf16, #tpu.memory_space<vmem>>, %arg1: memref<27x128xbf16, #tpu.memory_space<vmem>>, %arg2: memref<1x128xf32, #tpu.memory_space<vmem>>, %arg3: memref<2x128xf32, #tpu.memory_space<vmem>>) attributes {dimension_semantics = [], scalar_prefetch = 0 : i64, scratch_operands = 0 : i64, tpu.core_type = #tpu.core_type<tc>} {
    %c0 = arith.constant 0 : index
    %c0_0 = arith.constant 0 : index
    %0 = vector.load %arg0[%c0, %c0_0] : memref<2x27xbf16, #tpu.memory_space<vmem>>, vector<2x27xbf16>
    %c0_1 = arith.constant 0 : index
    %c0_2 = arith.constant 0 : index
    %1 = vector.load %arg1[%c0_1, %c0_2] : memref<27x128xbf16, #tpu.memory_space<vmem>>, vector<27x128xbf16>
    %cst = arith.constant dense<0.000000e+00> : vector<2x128xf32>
    %2 = tpu.matmul %0, %1, %cst {dimension_numbers = #tpu.dot_dimension_numbers<[1], [0], [0], [1], [0, 0, 1, 1], [], []>} : vector<2x27xbf16>, vector<27x128xbf16>, vector<2x128xf32> -> vector<2x128xf32>
    %c0_3 = arith.constant 0 : index
    %c0_4 = arith.constant 0 : index
    %3 = vector.load %arg2[%c0_3, %c0_4] : memref<1x128xf32, #tpu.memory_space<vmem>>, vector<1x128xf32>
    %4 = vector.broadcast %3 : vector<1x128xf32> to vector<2x128xf32>
    %5 = arith.addf %2, %4 : vector<2x128xf32>
    %c0_5 = arith.constant 0 : index
    %c0_6 = arith.constant 0 : index
    %6 = vector.load %arg3[%c0_5, %c0_6] : memref<2x128xf32, #tpu.memory_space<vmem>>, vector<2x128xf32>
    tpu.vector_store %arg3[%c0_5, %c0_6], %5 {strides = array<i32>} : memref<2x128xf32, #tpu.memory_space<vmem>>, vector<2x128xf32>,
    return
  }
}

</mosaic_0001>

<llo_original>
// kernel: convnet_forward.5
$region0: #{convnet_forward.5}
  #allocation0 [shape = 'u32[]', space=smem, size = 0x4, offset = 0x4, fixed_abs, tag = 'smem constant byte address 0x4 - core index']
  #allocation1 [shape = 'u32[144,128]{1,0:T(1,128)}', space=vmem, size = 0x12000, scoped, tag = 'internal scratch']
  %s0 = inlined_call_operand.vmem [shape: bf16[2,27], index: 0, kind: input, shape index: {}]
  %s1 = inlined_call_operand.vmem [shape: bf16[27,128], index: 1, kind: input, shape index: {}]
  %s2 = inlined_call_operand.vmem [shape: f32[1,128], index: 2, kind: input, shape index: {}]
  %s3 = inlined_call_operand.hbm [shape: f32[2,128], index: 3, kind: output, shape index: {}]
  %s4 = sld [smem:[#allocation0]]
  $region22: #{convnet_forward.5} parent=0
    _
  %s6 = ssub.s32 1, %s4
  %s7 = scalar_select 0, %s6, %s4
  $region1: #{convnet_forward.5} parent=0
    #allocation2 [shape = 'u8[1024]{0}', space=vmem, size = 0x400, scoped, tag = 'output window, operand 0, single buffered']
    #allocation3 [shape = 's32[1]{0}', space=sflag, size = 0x4, scoped, tag = 'scoped memory for convnet_forward.5']
    %8 = vsyncpa [#allocation3], 0
    // Predicated region
    $region2: #{convnet_forward.5} parent=1 // pred_check
      _
    $region3: #{convnet_forward.5} parent=1 // pred_check_branch
      %10 = sbr.rel (0) target = $region5
    $region4: #{convnet_forward.5} parent=1 // pred_region
      _
    $region5: #{convnet_forward.5} parent=1 // pred_fallthru
      _
    // Predicated region
    $region6: #{convnet_forward.5} parent=1 // pred_check
      _
    $region7: #{convnet_forward.5} parent=1 // pred_check_branch
      %12 = sbr.rel (0) target = $region9
    $region8: #{convnet_forward.5} parent=1 // pred_region
      _
    $region9: #{convnet_forward.5} parent=1 // pred_fallthru
      _
    // Predicated region
    $region10: #{convnet_forward.5} parent=1 // pred_check
      _
    $region11: #{convnet_forward.5} parent=1 // pred_check_branch
      %14 = sbr.rel (0) target = $region13
    $region12: #{convnet_forward.5} parent=1 // pred_region
      _
    $region13: #{convnet_forward.5} parent=1 // pred_fallthru
      _
    %v16 = vld [vmem:[%s0] sm:$0x1]
    %v17 = vld [vmem:[%s1] sm:$0xf]
    %v18 = vld [vmem:[%s1 + $0x4] sm:$0xf]
    %v19 = vld [vmem:[%s1 + $0x8] sm:$0xf]
    %v20 = vld [vmem:[%s1 + $0xc] sm:$0x3]
    %v21 = vld [vmem:[%s2] sm:$0x1]
    %v23 = vlaneseq
    %v24 = vshrl.u32 %v23, 7
    %v25 = vsub.s32 0, %v24
    %v26 = vrot.slane %v21, %v25
    %v32 = vunpack.c.l.b16 %v17
    %v33 = vunpack.c.l.b16 %v18
    %v34 = vunpack.c.l.b16 %v19
    %v35 = vunpack.c.l.b16 %v20
    %v36 = vpack.c.b16 %v33, %v32
    %v37 = vpack.c.b16 %v35, %v34
    %vm39 = vcmask 220160
    %v41 = vsel %vm39, %v16, 0
    %vm43 = vcmask 1044480
    %vm44 = vcmask 1045504
    %v45 = vsel %vm43, 4294967295, 65535
    %v46 = vsel %vm44, %v45, 0
    %v48 = vand.u32 %v37, %v46
    %50 = vmatprep.subr.bf16.mxu0 0
    %51 = vmatpush1.bf16.msra.mxu0 %v36
    %52 = vmatprep.subr.bf16.mxu0 0
    %53 = vmatpush1.bf16.msra.mxu0 %v48
    %54 = vmatprep.subr.bf16.mxu0 0
    %55 = vmatpush1.bf16.msra.mxu0 0
    %56 = vmatprep.subr.bf16.mxu0 0
    %57 = vmatpush1.bf16.msra.mxu0 0
    %58 = vmatprep.subr.bf16.mxu0 0
    %59 = vmatpush1.bf16.msra.mxu0 0
    %60 = vmatprep.subr.bf16.mxu0 0
    %61 = vmatpush1.bf16.msra.mxu0 0
    %62 = vmatprep.subr.bf16.mxu0 0
    %63 = vmatpush1.bf16.msra.mxu0 0
    %64 = vmatprep.subr.bf16.mxu0 0
    %65 = vmatpush1.bf16.msra.mxu0 0
    %66 = vmatprep.subr.bf16.mxu0 0
    %67 = vmatpush1.bf16.msra.mxu0 0
    %68 = vmatprep.subr.bf16.mxu0 0
    %69 = vmatpush1.bf16.msra.mxu0 0
    %70 = vmatprep.subr.bf16.mxu0 0
    %71 = vmatpush1.bf16.msra.mxu0 0
    %72 = vmatprep.subr.bf16.mxu0 0
    %73 = vmatpush1.bf16.msra.mxu0 0
    %74 = vmatprep.subr.bf16.mxu0 0
    %75 = vmatpush1.bf16.msra.mxu0 0
    %76 = vmatprep.subr.bf16.mxu0 0
    %77 = vmatpush1.bf16.msra.mxu0 0
    %78 = vmatprep.subr.bf16.mxu0 0
    %79 = vmatpush1.bf16.msra.mxu0 0
    %80 = vmatprep.subr.bf16.mxu0 0
    %81 = vmatpush1.bf16.msra.mxu0 0
    %82 = vmatprep.mubr.bf16.mxu0 0
    %83 = vmatmul.mubr.bf16.gmra.mrb[0].mxu0 %v41
    %v84 = vpop.f32.mrb[0].mxu0
    %v85 = vadd.f32 %v26, %v84
    %v86 = vpop.f32.mrb[0].mxu0
    %v87 = vpop.f32.mrb[0].mxu0
    %v88 = vpop.f32.mrb[0].mxu0
    %89 = vdwg.mxu0
    %90 = vst [vmem:[#allocation2] sm:$0x3] %v85
    // Predicated region
    $region14: #{convnet_forward.5} parent=1 // pred_check
      _
    $region15: #{convnet_forward.5} parent=1 // pred_check_branch
      %92 = sbr.rel (0) target = $region17
    $region16: #{convnet_forward.5} parent=1 // pred_region
      %s94 = ssub.s32 32, 32
      %95 = vsyncadd [#allocation3], %s94
      %s97 = sshll.u32 [#allocation2], 4
      %s98 = int_to_ptr.vmem [resolvable:$true] %s97
      %100 = dma.vmem_to_hbm [thread:$0]  %s98, 32, %s3, [#allocation3]
    $region17: #{convnet_forward.5} parent=1 // pred_fallthru
      _
    // Predicated region
    $region18: #{convnet_forward.5} parent=1 // pred_check
      _
    $region19: #{convnet_forward.5} parent=1 // pred_check_branch
      %102 = sbr.rel (0) target = $region21
    $region20: #{convnet_forward.5} parent=1 // pred_region
      %103 = dma.done [#allocation3], 32
    $region21: #{convnet_forward.5} parent=1 // pred_fallthru
      _
    %104 = vsyncpa [#allocation3], 1

// kernel: convnet_forward.4
$region0: #{convnet_forward.4}
  #allocation0 [shape = 'u32[]', space=smem, size = 0x4, offset = 0x4, fixed_abs, tag = 'smem constant byte address 0x4 - core index']
  #allocation1 [shape = 'u32[144,128]{1,0:T(1,128)}', space=vmem, size = 0x12000, scoped, tag = 'internal scratch']
  %s0 = inlined_call_operand.vmem [shape: bf16[2,12,256], index: 0, kind: input, shape index: {}]
  %s1 = inlined_call_operand.vmem [shape: bf16[4,3,12], index: 1, kind: input, shape index: {}]
  %s2 = inlined_call_operand.vmem [shape: f32[3,1], index: 2, kind: input, shape index: {}]
  %s3 = inlined_call_operand.vmem [shape: bf16[2,3,128], index: 3, kind: output, shape index: {}]
  %s4 = sld [smem:[#allocation0]]
  $region45: #{convnet_forward.4} parent=0
    _
  %s6 = ssub.s32 1, %s4
  %s7 = scalar_select 0, %s6, %s4
  loop: start=0, step=1, limit=4
  $region2: #{convnet_forward.4} parent=0 // loop_pre_header
    _
  $region3: #{convnet_forward.4} parent=0 // loop_header
    %s9 = sphi 0, %s13
    %p10 = scmp.ge.s32.totalorder %s9, 4
    %s19 = sphi 0, %s21
    %s22 = sphi 0, %s19
    %s23 = sphi 0, %s22
    %s39 = sphi 0, %s23
    %s43 = sphi 0, %s43
    %s45 = sphi 0, %s43
    %s46 = sphi 0, %s45
    %s60 = sphi 0, %s46
    %s64 = sphi 0, %s64
    %s66 = sphi 0, %s64
    %s67 = sphi 0, %s66
    %s81 = sphi 0, %s67
    %s87 = sphi 0, %s89
    %s90 = sphi 0, %s87
    %s91 = sphi 0, %s90
    %s107 = sphi 0, %s91
  $region4: #{convnet_forward.4} parent=0 // loop_header_branch
    %12 = sbr.rel (%p10) target = $region8
  $region5: #{convnet_forward.4} parent=0 // loop_body
    %s14 = ssub.s32 %s9, 1
    %s15 = ssub.s32 %s9, 2
    %s16 = sadd.s32 %s9, 1
    %s17 = ssub.s32 %s9, %s16
    %p18 = scmp.eq.s32.totalorder %s17, 0
    %s20 = sadd.s32 %s19, 1
    %s21 = scalar_select %p18, %s19, %s20
    %p24 = pneg %p18
    %p25 = scmp.eq.s32.totalorder %s9, 1
    %p26 = por %p24, %p25
    %p27 = scmp.ne.s32.totalorder %s19, %s22
    %p28 = scmp.eq.s32.totalorder %s9, 0
    %p29 = por %p27, %p28
    %p30 = scmp.ne.s32.totalorder %s19, %s22
    %p31 = scmp.eq.s32.totalorder %s14, 1
    %p32 = por %p30, %p31
    %p33 = scmp.ne.s32.totalorder %s22, %s23
    %p34 = scmp.eq.s32.totalorder %s14, 0
    %p35 = por %p33, %p34
    %p36 = scmp.ne.s32.totalorder %s22, %s23
    %p37 = scmp.eq.s32.totalorder %s15, 1
    %p38 = por %p36, %p37
    %p40 = scmp.ne.s32.totalorder %s23, %s39
    %p41 = scmp.eq.s32.totalorder %s15, 0
    %p42 = por %p40, %p41
    %s44 = sadd.s32 %s43, 1
    %p47 = scmp.eq.s32.totalorder %s9, 1
    %p48 = scmp.ne.s32.totalorder %s43, %s45
    %p49 = scmp.eq.s32.totalorder %s9, 0
    %p50 = por %p48, %p49
    %p51 = scmp.ne.s32.totalorder %s43, %s45
    %p52 = scmp.eq.s32.totalorder %s14, 1
    %p53 = por %p51, %p52
    %p54 = scmp.ne.s32.totalorder %s45, %s46
    %p55 = scmp.eq.s32.totalorder %s14, 0
    %p56 = por %p54, %p55
    %p57 = scmp.ne.s32.totalorder %s45, %s46
    %p58 = scmp.eq.s32.totalorder %s15, 1
    %p59 = por %p57, %p58
    %p61 = scmp.ne.s32.totalorder %s46, %s60
    %p62 = scmp.eq.s32.totalorder %s15, 0
    %p63 = por %p61, %p62
    %s65 = sadd.s32 %s64, 1
    %p68 = scmp.eq.s32.totalorder %s9, 1
    %p69 = scmp.ne.s32.totalorder %s64, %s66
    %p70 = scmp.eq.s32.totalorder %s9, 0
    %p71 = por %p69, %p70
    %p72 = scmp.ne.s32.totalorder %s64, %s66
    %p73 = scmp.eq.s32.totalorder %s14, 1
    %p74 = por %p72, %p73
    %p75 = scmp.ne.s32.totalorder %s66, %s67
    %p76 = scmp.eq.s32.totalorder %s14, 0
    %p77 = por %p75, %p76
    %p78 = scmp.ne.s32.totalorder %s66, %s67
    %p79 = scmp.eq.s32.totalorder %s15, 1
    %p80 = por %p78, %p79
    %p82 = scmp.ne.s32.totalorder %s67, %s81
    %p83 = scmp.eq.s32.totalorder %s15, 0
    %p84 = por %p82, %p83
    %s85 = ssub.s32 %s9, %s16
    %p86 = scmp.eq.s32.totalorder %s85, 0
    %s88 = sadd.s32 %s87, 1
    %s89 = scalar_select %p86, %s87, %s88
    %p92 = pneg %p86
    %p93 = scmp.eq.s32.totalorder %s9, 1
    %p94 = por %p92, %p93
    %p95 = scmp.ne.s32.totalorder %s87, %s90
    %p96 = scmp.eq.s32.totalorder %s9, 0
    %p97 = por %p95, %p96
    %p98 = scmp.ne.s32.totalorder %s87, %s90
    %p99 = scmp.eq.s32.totalorder %s14, 1
    %p100 = por %p98, %p99
    %p101 = scmp.ne.s32.totalorder %s90, %s91
    %p102 = scmp.eq.s32.totalorder %s14, 0
    %p103 = por %p101, %p102
    %p104 = scmp.ne.s32.totalorder %s90, %s91
    %p105 = scmp.eq.s32.totalorder %s15, 1
    %p106 = por %p104, %p105
    %p108 = scmp.ne.s32.totalorder %s91, %s107
    %p109 = scmp.eq.s32.totalorder %s15, 0
    %p110 = por %p108, %p109
    %p111 = scmp.le.s32.totalorder 1, %s9
    %p112 = scmp.lt.s32.totalorder %s9, 3
    %p113 = pnand %p111, %p112
    %p114 = pneg %p113
    // Predicated region
    $region9: #{convnet_forward.4} parent=5 // pred_check
      _
    $region10: #{convnet_forward.4} parent=5 // pred_check_branch
      %116 = sbr.rel (%p113) target = $region12
    $region11: #{convnet_forward.4} parent=5 // pred_region
      %s117 = ssub.s32 %s9, 1
      // Predicated region
      $region13: #{convnet_forward.4} parent=11 // pred_check
        %p118 = pneg %p56
      $region14: #{convnet_forward.4} parent=11 // pred_check_branch
        %120 = sbr.rel (%p118) target = $region16
      $region15: #{convnet_forward.4} parent=11 // pred_region
        _
      $region16: #{convnet_forward.4} parent=11 // pred_fallthru
        _
      // Predicated region
      $region17: #{convnet_forward.4} parent=11 // pred_check
        %p121 = pneg %p77
      $region18: #{convnet_forward.4} parent=11 // pred_check_branch
        %123 = sbr.rel (%p121) target = $region20
      $region19: #{convnet_forward.4} parent=11 // pred_region
        _
      $region20: #{convnet_forward.4} parent=11 // pred_fallthru
        _
    $region12: #{convnet_forward.4} parent=5 // pred_fallthru
      _
    %p124 = scmp.lt.s32.totalorder %s9, 2
    // Predicated region
    $region21: #{convnet_forward.4} parent=5 // pred_check
      %p125 = pneg %p124
    $region22: #{convnet_forward.4} parent=5 // pred_check_branch
      %127 = sbr.rel (%p125) target = $region24
    $region23: #{convnet_forward.4} parent=5 // pred_region
      // Predicated region
      $region25: #{convnet_forward.4} parent=23 // pred_check
        %p128 = pneg %p29
      $region26: #{convnet_forward.4} parent=23 // pred_check_branch
        %130 = sbr.rel (%p128) target = $region28
      $region27: #{convnet_forward.4} parent=23 // pred_region
        %p131 = scmp.lt.s32.totalorder %s9, 1
        %s132 = scalar_select %p131, %s9, 1
        %s133 = smul.addr %s132, 4
        %s134 = smul.addr %s133, 4
        %s135 = scalar_lea.vmem %s0, %s134
      $region28: #{convnet_forward.4} parent=23 // pred_fallthru
        _
    $region24: #{convnet_forward.4} parent=5 // pred_fallthru
      _
    %p136 = scmp.le.s32.totalorder 1, %s9
    %p137 = scmp.lt.s32.totalorder %s9, 3
    %p138 = pnand %p136, %p137
    %p139 = pneg %p138
    // Predicated region
    $region29: #{convnet_forward.4} parent=5 // pred_check
      _
    $region30: #{convnet_forward.4} parent=5 // pred_check_branch
      %141 = sbr.rel (%p138) target = $region32
    $region31: #{convnet_forward.4} parent=5 // pred_region
      %s142 = ssub.s32 %s9, 1
      %p143 = scmp.lt.s32.totalorder %s14, 1
      %s144 = scalar_select %p143, %s14, 1
      %s145 = smul.addr %s144, 4
      %s146 = smul.addr %s145, 4
      %s147 = scalar_lea.vmem %s0, %s146
      %p148 = pneg %p35
      %p149 = pneg %p32
      %p150 = pneg %p56
      %p151 = pneg %p53
      %p152 = pneg %p77
      %p153 = pneg %p74
      %p154 = pneg %p103
      %p155 = pneg %p100
      %p156 = scmp.lt.s32.totalorder %s14, 1
      %s157 = scalar_select %p156, %s14, 1
      %s158 = smul.addr %s157, 2
      %s159 = scalar_lea.vmem %s3, %s158
      %p160 = scmp.lt.s32.totalorder %s14, 1
      %s161 = scalar_select %p160, %s14, 1
      %s162 = smul.addr %s161, 4
      %s163 = smul.addr %s162, 4
      %s164 = scalar_lea.vmem %s0, %s163
      %p165 = scmp.lt.s32.totalorder %s14, 1
      %s166 = scalar_select %p165, %s14, 1
      %s167 = smul.addr %s166, 2
      %s168 = scalar_lea.vmem %s3, %s167
      %v170 = vld [vmem:[%s164] sm:$0xff]
      %v171 = vld [vmem:[%s164 + $0x8] sm:$0x33]
      %v172 = vld [vmem:[%s1] sm:$0x3]
      %s173 = scalar_lea.vmem %s1, 2
      %v174 = vld [vmem:[%s173] sm:$0x3]
      %v177 = vunpack.c.l.b16 %v170
      %v178 = vunpack.c.h.b16 %v170
      %v179 = vunpack.c.l.b16 %v171
      %v180 = vunpack.c.h.b16 %v171
      %v181 = vpack.c.b16 %v179, %v177
      %v182 = vpack.c.b16 %v180, %v178
      %183 = vrot.lane.b32.xlu0 %v181, 127
      %v184 = vpop.permute.xlu0 %183
      %185 = vrot.lane.b32.xlu0 %v182, 127
      %v186 = vpop.permute.xlu0 %185
      %vm187 = vcmask 1039360
      %v188 = vsel %vm187, %v184, %v186
      %vm189 = vcmask 97280
      %v191 = vsel %vm189, %v174, 0
      %vm193 = vcmask 1045504
      %v195 = vsel %vm193, %v188, 0
      %v198 = vsel %vm193, %v186, 0
      %200 = vmatprep.subr.bf16.mxu0 %v198
      %201 = vmatpush1.bf16.msra.mxu0 %v195
      %202 = vmatprep.subr.bf16.mxu0 0
      %203 = vmatpush1.bf16.msra.mxu0 0
      %204 = vmatprep.subr.bf16.mxu0 0
      %205 = vmatpush1.bf16.msra.mxu0 0
      %206 = vmatprep.subr.bf16.mxu0 0
      %207 = vmatpush1.bf16.msra.mxu0 0
      %208 = vmatprep.subr.bf16.mxu0 0
      %209 = vmatpush1.bf16.msra.mxu0 0
      %210 = vmatprep.subr.bf16.mxu0 0
      %211 = vmatpush1.bf16.msra.mxu0 0
      %212 = vmatprep.subr.bf16.mxu0 0
      %213 = vmatpush1.bf16.msra.mxu0 0
      %214 = vmatprep.subr.bf16.mxu0 0
      %215 = vmatpush1.bf16.msra.mxu0 0
      %216 = vmatprep.subr.bf16.mxu0 0
      %217 = vmatpush1.bf16.msra.mxu0 0
      %218 = vmatprep.subr.bf16.mxu0 0
      %219 = vmatpush1.bf16.msra.mxu0 0
      %220 = vmatprep.subr.bf16.mxu0 0
      %221 = vmatpush1.bf16.msra.mxu0 0
      %222 = vmatprep.subr.bf16.mxu0 0
      %223 = vmatpush1.bf16.msra.mxu0 0
      %224 = vmatprep.subr.bf16.mxu0 0
      %225 = vmatpush1.bf16.msra.mxu0 0
      %226 = vmatprep.subr.bf16.mxu0 0
      %227 = vmatpush1.bf16.msra.mxu0 0
      %228 = vmatprep.subr.bf16.mxu0 0
      %229 = vmatpush1.bf16.msra.mxu0 0
      %230 = vmatprep.subr.bf16.mxu0 0
      %231 = vmatpush1.bf16.msra.mxu0 0
      %232 = vmatprep.mubr.bf16.mxu0 0
      %233 = vmatmul.mubr.bf16.gmra.mrb[0].mxu0 %v191
      %v234 = vpop.f32.mrb[0].mxu0
      %v235 = vadd.f32 0.0, %v234
      %v236 = vpop.f32.mrb[0].mxu0
      %v237 = vadd.f32 0.0, %v236
      %v238 = vpop.f32.mrb[0].mxu0
      %v239 = vpop.f32.mrb[0].mxu0
      %240 = vdwg.mxu0
      %v242 = vsel %vm189, %v172, 0
      %v245 = vsel %vm193, %v181, 0
      %v248 = vsel %vm193, %v182, 0
      %250 = vmatprep.subr.bf16.mxu0 %v248
      %251 = vmatpush1.bf16.msra.mxu0 %v245
      %252 = vmatprep.subr.bf16.mxu0 0
      %253 = vmatpush1.bf16.msra.mxu0 0
      %254 = vmatprep.subr.bf16.mxu0 0
      %255 = vmatpush1.bf16.msra.mxu0 0
      %256 = vmatprep.subr.bf16.mxu0 0
      %257 = vmatpush1.bf16.msra.mxu0 0
      %258 = vmatprep.subr.bf16.mxu0 0
      %259 = vmatpush1.bf16.msra.mxu0 0
      %260 = vmatprep.subr.bf16.mxu0 0
      %261 = vmatpush1.bf16.msra.mxu0 0
      %262 = vmatprep.subr.bf16.mxu0 0
      %263 = vmatpush1.bf16.msra.mxu0 0
      %264 = vmatprep.subr.bf16.mxu0 0
      %265 = vmatpush1.bf16.msra.mxu0 0
      %266 = vmatprep.subr.bf16.mxu0 0
      %267 = vmatpush1.bf16.msra.mxu0 0
      %268 = vmatprep.subr.bf16.mxu0 0
      %269 = vmatpush1.bf16.msra.mxu0 0
      %270 = vmatprep.subr.bf16.mxu0 0
      %271 = vmatpush1.bf16.msra.mxu0 0
      %272 = vmatprep.subr.bf16.mxu0 0
      %273 = vmatpush1.bf16.msra.mxu0 0
      %274 = vmatprep.subr.bf16.mxu0 0
      %275 = vmatpush1.bf16.msra.mxu0 0
      %276 = vmatprep.subr.bf16.mxu0 0
      %277 = vmatpush1.bf16.msra.mxu0 0
      %278 = vmatprep.subr.bf16.mxu0 0
      %279 = vmatpush1.bf16.msra.mxu0 0
      %280 = vmatprep.subr.bf16.mxu0 0
      %281 = vmatpush1.bf16.msra.mxu0 0
      %282 = vmatprep.mubr.bf16.mxu0 0
      %283 = vmatmul.mubr.bf16.gmra.mrb[0].mxu0 %v242
      %v284 = vpop.f32.mrb[0].mxu0
      %v285 = vadd.f32 %v235, %v284
      %v286 = vpop.f32.mrb[0].mxu0
      %v287 = vadd.f32 %v237, %v286
      %v288 = vpop.f32.mrb[0].mxu0
      %v289 = vpop.f32.mrb[0].mxu0
      %290 = vdwg.mxu0
      %s291 = scalar_lea.vmem %s1, 4
      %v292 = vld [vmem:[%s291] sm:$0x3]
      %293 = vrot.lane.b32.xlu0 %v181, 123
      %v294 = vpop.permute.xlu0 %293
      %295 = vrot.lane.b32.xlu0 %v182, 123
      %v296 = vpop.permute.xlu0 %295
      %vm297 = vcmask 1006592
      %v298 = vsel %vm297, %v294, %v296
      %v300 = vsel %vm189, %v292, 0
      %v303 = vsel %vm193, %v298, 0
      %v306 = vsel %vm193, %v296, 0
      %308 = vmatprep.subr.bf16.mxu0 %v306
      %309 = vmatpush1.bf16.msra.mxu0 %v303
      %310 = vmatprep.subr.bf16.mxu0 0
      %311 = vmatpush1.bf16.msra.mxu0 0
      %312 = vmatprep.subr.bf16.mxu0 0
      %313 = vmatpush1.bf16.msra.mxu0 0
      %314 = vmatprep.subr.bf16.mxu0 0
      %315 = vmatpush1.bf16.msra.mxu0 0
      %316 = vmatprep.subr.bf16.mxu0 0
      %317 = vmatpush1.bf16.msra.mxu0 0
      %318 = vmatprep.subr.bf16.mxu0 0
      %319 = vmatpush1.bf16.msra.mxu0 0
      %320 = vmatprep.subr.bf16.mxu0 0
      %321 = vmatpush1.bf16.msra.mxu0 0
      %322 = vmatprep.subr.bf16.mxu0 0
      %323 = vmatpush1.bf16.msra.mxu0 0
      %324 = vmatprep.subr.bf16.mxu0 0
      %325 = vmatpush1.bf16.msra.mxu0 0
      %326 = vmatprep.subr.bf16.mxu0 0
      %327 = vmatpush1.bf16.msra.mxu0 0
      %328 = vmatprep.subr.bf16.mxu0 0
      %329 = vmatpush1.bf16.msra.mxu0 0
      %330 = vmatprep.subr.bf16.mxu0 0
      %331 = vmatpush1.bf16.msra.mxu0 0
      %332 = vmatprep.subr.bf16.mxu0 0
      %333 = vmatpush1.bf16.msra.mxu0 0
      %334 = vmatprep.subr.bf16.mxu0 0
      %335 = vmatpush1.bf16.msra.mxu0 0
      %336 = vmatprep.subr.bf16.mxu0 0
      %337 = vmatpush1.bf16.msra.mxu0 0
      %338 = vmatprep.subr.bf16.mxu0 0
      %339 = vmatpush1.bf16.msra.mxu0 0
      %340 = vmatprep.mubr.bf16.mxu0 0
      %341 = vmatmul.mubr.bf16.gmra.mrb[0].mxu0 %v300
      %v342 = vpop.f32.mrb[0].mxu0
      %v343 = vadd.f32 0.0, %v342
      %v344 = vpop.f32.mrb[0].mxu0
      %v345 = vadd.f32 0.0, %v344
      %v346 = vpop.f32.mrb[0].mxu0
      %v347 = vpop.f32.mrb[0].mxu0
      %348 = vdwg.mxu0
      %v349 = vadd.f32 %v285, %v343
      %v350 = vadd.f32 %v287, %v345
      %s351 = scalar_lea.vmem %s1, 6
      %v352 = vld [vmem:[%s351] sm:$0x3]
      %353 = vrot.lane.b32.xlu0 %v181, 122
      %v354 = vpop.permute.xlu0 %353
      %355 = vrot.lane.b32.xlu0 %v182, 122
      %v356 = vpop.permute.xlu0 %355
      %vm357 = vcmask 998400
      %v358 = vsel %vm357, %v354, %v356
      %v360 = vsel %vm189, %v352, 0
      %v363 = vsel %vm193, %v358, 0
      %v366 = vsel %vm193, %v356, 0
      %368 = vmatprep.subr.bf16.mxu0 %v366
      %369 = vmatpush1.bf16.msra.mxu0 %v363
      %370 = vmatprep.subr.bf16.mxu0 0
      %371 = vmatpush1.bf16.msra.mxu0 0
      %372 = vmatprep.subr.bf16.mxu0 0
      %373 = vmatpush1.bf16.msra.mxu0 0
      %374 = vmatprep.subr.bf16.mxu0 0
      %375 = vmatpush1.bf16.msra.mxu0 0
      %376 = vmatprep.subr.bf16.mxu0 0
      %377 = vmatpush1.bf16.msra.mxu0 0
      %378 = vmatprep.subr.bf16.mxu0 0
      %379 = vmatpush1.bf16.msra.mxu0 0
      %380 = vmatprep.subr.bf16.mxu0 0
      %381 = vmatpush1.bf16.msra.mxu0 0
      %382 = vmatprep.subr.bf16.mxu0 0
      %383 = vmatpush1.bf16.msra.mxu0 0
      %384 = vmatprep.subr.bf16.mxu0 0
      %385 = vmatpush1.bf16.msra.mxu0 0
      %386 = vmatprep.subr.bf16.mxu0 0
      %387 = vmatpush1.bf16.msra.mxu0 0
      %388 = vmatprep.subr.bf16.mxu0 0
      %389 = vmatpush1.bf16.msra.mxu0 0
      %390 = vmatprep.subr.bf16.mxu0 0
      %391 = vmatpush1.bf16.msra.mxu0 0
      %392 = vmatprep.subr.bf16.mxu0 0
      %393 = vmatpush1.bf16.msra.mxu0 0
      %394 = vmatprep.subr.bf16.mxu0 0
      %395 = vmatpush1.bf16.msra.mxu0 0
      %396 = vmatprep.subr.bf16.mxu0 0
      %397 = vmatpush1.bf16.msra.mxu0 0
      %398 = vmatprep.subr.bf16.mxu0 0
      %399 = vmatpush1.bf16.msra.mxu0 0
      %400 = vmatprep.mubr.bf16.mxu0 0
      %401 = vmatmul.mubr.bf16.gmra.mrb[0].mxu0 %v360
      %v402 = vpop.f32.mrb[0].mxu0
      %v403 = vadd.f32 0.0, %v402
      %v404 = vpop.f32.mrb[0].mxu0
      %v405 = vadd.f32 0.0, %v404
      %v406 = vpop.f32.mrb[0].mxu0
      %v407 = vpop.f32.mrb[0].mxu0
      %408 = vdwg.mxu0
      %v409 = vadd.f32 %v349, %v403
      %v410 = vadd.f32 %v350, %v405
      %v411 = vld [vmem:[%s2] sm:$0x7]
      %413 = vset.pattern.permute.xlu0 0
      %414 = vperm.xlu0 %413, %v411
      %v415 = vpop.permute.xlu0 %414
      %v417 = vadd.f32 %v409, %v415
      %v418 = vadd.f32 %v410, %v415
      %v419 = vmax.f32 %v417, 0.0
      %v420 = vmax.f32 %v418, 0.0
      %423 = vrot.lane.b32.xlu0 %v419, 127
      %v424 = vpop.permute.xlu0 %423
      %425 = vrot.lane.b32.xlu0 %v420, 127
      %v426 = vpop.permute.xlu0 %425
      %vm427 = vcmask 1039360
      %v428 = vsel %vm427, %v424, %v426
      %v431 = vmax.f32 %v419, %v428
      %v432 = vmax.f32 %v420, %v426
      %435 = vrot.lane.b32.xlu0 %v431, 123
      %v436 = vpop.permute.xlu0 %435
      %437 = vrot.lane.b32.xlu0 %v432, 123
      %v438 = vpop.permute.xlu0 %437
      %vm439 = vcmask 1006592
      %v440 = vsel %vm439, %v436, %v438
      %v442 = vmax.f32 %v431, %v440
      %v443 = vpack.c.bf16 %v442, %v442
      %vm444 = vcmask 1041408
      %vm445 = vsmask.f32 1280
      %vm446 = vmand %vm444, %vm445
      %v447 = vld [vmem:[%s168] sm:$0x3]
      %v448 = vsel %vm446, %v443, %v447
      %449 = vst [vmem:[%s168] sm:$0x3] %v448
      %p450 = scmp.lt.s32.totalorder %s14, 1
      %s451 = scalar_select %p450, %s14, 1
      %s452 = smul.addr %s451, 2
      %s453 = scalar_lea.vmem %s3, %s452
      // Predicated region
      $region33: #{convnet_forward.4} parent=31 // pred_check
        %p454 = pneg %p100
      $region34: #{convnet_forward.4} parent=31 // pred_check_branch
        %456 = sbr.rel (%p454) target = $region36
      $region35: #{convnet_forward.4} parent=31 // pred_region
        _
      $region36: #{convnet_forward.4} parent=31 // pred_fallthru
        _
    $region32: #{convnet_forward.4} parent=5 // pred_fallthru
      _
    %p457 = scmp.le.s32.totalorder 2, %s9
    // Predicated region
    $region37: #{convnet_forward.4} parent=5 // pred_check
      %p458 = pneg %p457
    $region38: #{convnet_forward.4} parent=5 // pred_check_branch
      %460 = sbr.rel (%p458) target = $region40
    $region39: #{convnet_forward.4} parent=5 // pred_region
      %s461 = ssub.s32 %s9, 2
      // Predicated region
      $region41: #{convnet_forward.4} parent=39 // pred_check
        %p462 = pneg %p106
      $region42: #{convnet_forward.4} parent=39 // pred_check_branch
        %464 = sbr.rel (%p462) target = $region44
      $region43: #{convnet_forward.4} parent=39 // pred_region
        %p465 = scmp.lt.s32.totalorder %s15, 1
        %s466 = scalar_select %p465, %s15, 1
        %s467 = smul.addr %s466, 2
        %s468 = scalar_lea.vmem %s3, %s467
      $region44: #{convnet_forward.4} parent=39 // pred_fallthru
        _
    $region40: #{convnet_forward.4} parent=5 // pred_fallthru
      _
  $region6: #{convnet_forward.4} parent=0 // loop_footer
    %s13 = sadd.s32 1, %s9
  $region7: #{convnet_forward.4} parent=0 // loop_footer_branch
    %8 = sbr.rel target = $region3
  $region8: #{convnet_forward.4} parent=0 // loop_exit
    _

// kernel: convnet_forward.3
$region0: #{convnet_forward.3}
  #allocation0 [shape = 'u32[]', space=smem, size = 0x4, offset = 0x4, fixed_abs, tag = 'smem constant byte address 0x4 - core index']
  #allocation1 [shape = 'u32[144,128]{1,0:T(1,128)}', space=vmem, size = 0x12000, scoped, tag = 'internal scratch']
  %s0 = inlined_call_operand.vmem [shape: bf16[2,4,256], index: 0, kind: input, shape index: {}]
  %s1 = inlined_call_operand.vmem [shape: bf16[4,3,4], index: 1, kind: input, shape index: {}]
  %s2 = inlined_call_operand.vmem [shape: f32[3,1], index: 2, kind: input, shape index: {}]
  %s3 = inlined_call_operand.vmem [shape: bf16[2,3,128], index: 3, kind: output, shape index: {}]
  %s4 = sld [smem:[#allocation0]]
  $region45: #{convnet_forward.3} parent=0
    _
  %s6 = ssub.s32 1, %s4
  %s7 = scalar_select 0, %s6, %s4
  loop: start=0, step=1, limit=4
  $region2: #{convnet_forward.3} parent=0 // loop_pre_header
    _
  $region3: #{convnet_forward.3} parent=0 // loop_header
    %s9 = sphi 0, %s13
    %p10 = scmp.ge.s32.totalorder %s9, 4
    %s19 = sphi 0, %s21
    %s22 = sphi 0, %s19
    %s23 = sphi 0, %s22
    %s39 = sphi 0, %s23
    %s43 = sphi 0, %s43
    %s45 = sphi 0, %s43
    %s46 = sphi 0, %s45
    %s60 = sphi 0, %s46
    %s64 = sphi 0, %s64
    %s66 = sphi 0, %s64
    %s67 = sphi 0, %s66
    %s81 = sphi 0, %s67
    %s87 = sphi 0, %s89
    %s90 = sphi 0, %s87
    %s91 = sphi 0, %s90
    %s107 = sphi 0, %s91
  $region4: #{convnet_forward.3} parent=0 // loop_header_branch
    %12 = sbr.rel (%p10) target = $region8
  $region5: #{convnet_forward.3} parent=0 // loop_body
    %s14 = ssub.s32 %s9, 1
    %s15 = ssub.s32 %s9, 2
    %s16 = sadd.s32 %s9, 1
    %s17 = ssub.s32 %s9, %s16
    %p18 = scmp.eq.s32.totalorder %s17, 0
    %s20 = sadd.s32 %s19, 1
    %s21 = scalar_select %p18, %s19, %s20
    %p24 = pneg %p18
    %p25 = scmp.eq.s32.totalorder %s9, 1
    %p26 = por %p24, %p25
    %p27 = scmp.ne.s32.totalorder %s19, %s22
    %p28 = scmp.eq.s32.totalorder %s9, 0
    %p29 = por %p27, %p28
    %p30 = scmp.ne.s32.totalorder %s19, %s22
    %p31 = scmp.eq.s32.totalorder %s14, 1
    %p32 = por %p30, %p31
    %p33 = scmp.ne.s32.totalorder %s22, %s23
    %p34 = scmp.eq.s32.totalorder %s14, 0
    %p35 = por %p33, %p34
    %p36 = scmp.ne.s32.totalorder %s22, %s23
    %p37 = scmp.eq.s32.totalorder %s15, 1
    %p38 = por %p36, %p37
    %p40 = scmp.ne.s32.totalorder %s23, %s39
    %p41 = scmp.eq.s32.totalorder %s15, 0
    %p42 = por %p40, %p41
    %s44 = sadd.s32 %s43, 1
    %p47 = scmp.eq.s32.totalorder %s9, 1
    %p48 = scmp.ne.s32.totalorder %s43, %s45
    %p49 = scmp.eq.s32.totalorder %s9, 0
    %p50 = por %p48, %p49
    %p51 = scmp.ne.s32.totalorder %s43, %s45
    %p52 = scmp.eq.s32.totalorder %s14, 1
    %p53 = por %p51, %p52
    %p54 = scmp.ne.s32.totalorder %s45, %s46
    %p55 = scmp.eq.s32.totalorder %s14, 0
    %p56 = por %p54, %p55
    %p57 = scmp.ne.s32.totalorder %s45, %s46
    %p58 = scmp.eq.s32.totalorder %s15, 1
    %p59 = por %p57, %p58
    %p61 = scmp.ne.s32.totalorder %s46, %s60
    %p62 = scmp.eq.s32.totalorder %s15, 0
    %p63 = por %p61, %p62
    %s65 = sadd.s32 %s64, 1
    %p68 = scmp.eq.s32.totalorder %s9, 1
    %p69 = scmp.ne.s32.totalorder %s64, %s66
    %p70 = scmp.eq.s32.totalorder %s9, 0
    %p71 = por %p69, %p70
    %p72 = scmp.ne.s32.totalorder %s64, %s66
    %p73 = scmp.eq.s32.totalorder %s14, 1
    %p74 = por %p72, %p73
    %p75 = scmp.ne.s32.totalorder %s66, %s67
    %p76 = scmp.eq.s32.totalorder %s14, 0
    %p77 = por %p75, %p76
    %p78 = scmp.ne.s32.totalorder %s66, %s67
    %p79 = scmp.eq.s32.totalorder %s15, 1
    %p80 = por %p78, %p79
    %p82 = scmp.ne.s32.totalorder %s67, %s81
    %p83 = scmp.eq.s32.totalorder %s15, 0
    %p84 = por %p82, %p83
    %s85 = ssub.s32 %s9, %s16
    %p86 = scmp.eq.s32.totalorder %s85, 0
    %s88 = sadd.s32 %s87, 1
    %s89 = scalar_select %p86, %s87, %s88
    %p92 = pneg %p86
    %p93 = scmp.eq.s32.totalorder %s9, 1
    %p94 = por %p92, %p93
    %p95 = scmp.ne.s32.totalorder %s87, %s90
    %p96 = scmp.eq.s32.totalorder %s9, 0
    %p97 = por %p95, %p96
    %p98 = scmp.ne.s32.totalorder %s87, %s90
    %p99 = scmp.eq.s32.totalorder %s14, 1
    %p100 = por %p98, %p99
    %p101 = scmp.ne.s32.totalorder %s90, %s91
    %p102 = scmp.eq.s32.totalorder %s14, 0
    %p103 = por %p101, %p102
    %p104 = scmp.ne.s32.totalorder %s90, %s91
    %p105 = scmp.eq.s32.totalorder %s15, 1
    %p106 = por %p104, %p105
    %p108 = scmp.ne.s32.totalorder %s91, %s107
    %p109 = scmp.eq.s32.totalorder %s15, 0
    %p110 = por %p108, %p109
    %p111 = scmp.le.s32.totalorder 1, %s9
    %p112 = scmp.lt.s32.totalorder %s9, 3
    %p113 = pnand %p111, %p112
    %p114 = pneg %p113
    // Predicated region
    $region9: #{convnet_forward.3} parent=5 // pred_check
      _
    $region10: #{convnet_forward.3} parent=5 // pred_check_branch
      %116 = sbr.rel (%p113) target = $region12
    $region11: #{convnet_forward.3} parent=5 // pred_region
      %s117 = ssub.s32 %s9, 1
      // Predicated region
      $region13: #{convnet_forward.3} parent=11 // pred_check
        %p118 = pneg %p56
      $region14: #{convnet_forward.3} parent=11 // pred_check_branch
        %120 = sbr.rel (%p118) target = $region16
      $region15: #{convnet_forward.3} parent=11 // pred_region
        _
      $region16: #{convnet_forward.3} parent=11 // pred_fallthru
        _
      // Predicated region
      $region17: #{convnet_forward.3} parent=11 // pred_check
        %p121 = pneg %p77
      $region18: #{convnet_forward.3} parent=11 // pred_check_branch
        %123 = sbr.rel (%p121) target = $region20
      $region19: #{convnet_forward.3} parent=11 // pred_region
        _
      $region20: #{convnet_forward.3} parent=11 // pred_fallthru
        _
    $region12: #{convnet_forward.3} parent=5 // pred_fallthru
      _
    %p124 = scmp.lt.s32.totalorder %s9, 2
    // Predicated region
    $region21: #{convnet_forward.3} parent=5 // pred_check
      %p125 = pneg %p124
    $region22: #{convnet_forward.3} parent=5 // pred_check_branch
      %127 = sbr.rel (%p125) target = $region24
    $region23: #{convnet_forward.3} parent=5 // pred_region
      // Predicated region
      $region25: #{convnet_forward.3} parent=23 // pred_check
        %p128 = pneg %p29
      $region26: #{convnet_forward.3} parent=23 // pred_check_branch
        %130 = sbr.rel (%p128) target = $region28
      $region27: #{convnet_forward.3} parent=23 // pred_region
        %p131 = scmp.lt.s32.totalorder %s9, 1
        %s132 = scalar_select %p131, %s9, 1
        %s133 = smul.addr %s132, 2
        %s134 = smul.addr %s133, 2
        %s135 = scalar_lea.vmem %s0, %s134
      $region28: #{convnet_forward.3} parent=23 // pred_fallthru
        _
    $region24: #{convnet_forward.3} parent=5 // pred_fallthru
      _
    %p136 = scmp.le.s32.totalorder 1, %s9
    %p137 = scmp.lt.s32.totalorder %s9, 3
    %p138 = pnand %p136, %p137
    %p139 = pneg %p138
    // Predicated region
    $region29: #{convnet_forward.3} parent=5 // pred_check
      _
    $region30: #{convnet_forward.3} parent=5 // pred_check_branch
      %141 = sbr.rel (%p138) target = $region32
    $region31: #{convnet_forward.3} parent=5 // pred_region
      %s142 = ssub.s32 %s9, 1
      %p143 = scmp.lt.s32.totalorder %s14, 1
      %s144 = scalar_select %p143, %s14, 1
      %s145 = smul.addr %s144, 2
      %s146 = smul.addr %s145, 2
      %s147 = scalar_lea.vmem %s0, %s146
      %p148 = pneg %p35
      %p149 = pneg %p32
      %p150 = pneg %p56
      %p151 = pneg %p53
      %p152 = pneg %p77
      %p153 = pneg %p74
      %p154 = pneg %p103
      %p155 = pneg %p100
      %p156 = scmp.lt.s32.totalorder %s14, 1
      %s157 = scalar_select %p156, %s14, 1
      %s158 = smul.addr %s157, 2
      %s159 = scalar_lea.vmem %s3, %s158
      %p160 = scmp.lt.s32.totalorder %s14, 1
      %s161 = scalar_select %p160, %s14, 1
      %s162 = smul.addr %s161, 2
      %s163 = smul.addr %s162, 2
      %s164 = scalar_lea.vmem %s0, %s163
      %p165 = scmp.lt.s32.totalorder %s14, 1
      %s166 = scalar_select %p165, %s14, 1
      %s167 = smul.addr %s166, 2
      %s168 = scalar_lea.vmem %s3, %s167
      %v170 = vld [vmem:[%s164] sm:$0xf]
      %v171 = vld [vmem:[%s1] sm:$0x3]
      %s172 = scalar_lea.vmem %s1, 2
      %v173 = vld [vmem:[%s172] sm:$0x3]
      %v176 = vunpack.c.l.s4 1983009808
      %v177 = vunpack.c.0.s8 %v176
      %v178 = vlaneseq
      %v179 = vshrl.u32 %v178, 7
      %v180 = vsub.s32 %v177, %v179
      %v181 = vrot.slane %v170, %v180
      %v182 = vcombine.high %v181, %v181
      %183 = vrot.lane.b32.xlu0 %v181, 127
      %v184 = vpop.permute.xlu0 %183
      %185 = vrot.lane.b32.xlu0 %v182, 127
      %v186 = vpop.permute.xlu0 %185
      %vm187 = vcmask 1039360
      %v188 = vsel %vm187, %v184, %v186
      %vm189 = vcmask 31744
      %v191 = vsel %vm189, %v173, 0
      %vm193 = vcmask 1041408
      %v195 = vsel %vm193, %v188, 0
      %v198 = vsel %vm193, %v186, 0
      %200 = vmatprep.subr.bf16.mxu0 %v198
      %201 = vmatpush1.bf16.msra.mxu0 %v195
      %202 = vmatprep.subr.bf16.mxu0 0
      %203 = vmatpush1.bf16.msra.mxu0 0
      %204 = vmatprep.subr.bf16.mxu0 0
      %205 = vmatpush1.bf16.msra.mxu0 0
      %206 = vmatprep.subr.bf16.mxu0 0
      %207 = vmatpush1.bf16.msra.mxu0 0
      %208 = vmatprep.subr.bf16.mxu0 0
      %209 = vmatpush1.bf16.msra.mxu0 0
      %210 = vmatprep.subr.bf16.mxu0 0
      %211 = vmatpush1.bf16.msra.mxu0 0
      %212 = vmatprep.subr.bf16.mxu0 0
      %213 = vmatpush1.bf16.msra.mxu0 0
      %214 = vmatprep.subr.bf16.mxu0 0
      %215 = vmatpush1.bf16.msra.mxu0 0
      %216 = vmatprep.subr.bf16.mxu0 0
      %217 = vmatpush1.bf16.msra.mxu0 0
      %218 = vmatprep.subr.bf16.mxu0 0
      %219 = vmatpush1.bf16.msra.mxu0 0
      %220 = vmatprep.subr.bf16.mxu0 0
      %221 = vmatpush1.bf16.msra.mxu0 0
      %222 = vmatprep.subr.bf16.mxu0 0
      %223 = vmatpush1.bf16.msra.mxu0 0
      %224 = vmatprep.subr.bf16.mxu0 0
      %225 = vmatpush1.bf16.msra.mxu0 0
      %226 = vmatprep.subr.bf16.mxu0 0
      %227 = vmatpush1.bf16.msra.mxu0 0
      %228 = vmatprep.subr.bf16.mxu0 0
      %229 = vmatpush1.bf16.msra.mxu0 0
      %230 = vmatprep.subr.bf16.mxu0 0
      %231 = vmatpush1.bf16.msra.mxu0 0
      %232 = vmatprep.mubr.bf16.mxu0 0
      %233 = vmatmul.mubr.bf16.gmra.mrb[0].mxu0 %v191
      %v234 = vpop.f32.mrb[0].mxu0
      %v235 = vadd.f32 0.0, %v234
      %v236 = vpop.f32.mrb[0].mxu0
      %v237 = vadd.f32 0.0, %v236
      %v238 = vpop.f32.mrb[0].mxu0
      %v239 = vpop.f32.mrb[0].mxu0
      %240 = vdwg.mxu0
      %v242 = vsel %vm189, %v171, 0
      %v245 = vsel %vm193, %v181, 0
      %v248 = vsel %vm193, %v182, 0
      %250 = vmatprep.subr.bf16.mxu0 %v248
      %251 = vmatpush1.bf16.msra.mxu0 %v245
      %252 = vmatprep.subr.bf16.mxu0 0
      %253 = vmatpush1.bf16.msra.mxu0 0
      %254 = vmatprep.subr.bf16.mxu0 0
      %255 = vmatpush1.bf16.msra.mxu0 0
      %256 = vmatprep.subr.bf16.mxu0 0
      %257 = vmatpush1.bf16.msra.mxu0 0
      %258 = vmatprep.subr.bf16.mxu0 0
      %259 = vmatpush1.bf16.msra.mxu0 0
      %260 = vmatprep.subr.bf16.mxu0 0
      %261 = vmatpush1.bf16.msra.mxu0 0
      %262 = vmatprep.subr.bf16.mxu0 0
      %263 = vmatpush1.bf16.msra.mxu0 0
      %264 = vmatprep.subr.bf16.mxu0 0
      %265 = vmatpush1.bf16.msra.mxu0 0
      %266 = vmatprep.subr.bf16.mxu0 0
      %267 = vmatpush1.bf16.msra.mxu0 0
      %268 = vmatprep.subr.bf16.mxu0 0
      %269 = vmatpush1.bf16.msra.mxu0 0
      %270 = vmatprep.subr.bf16.mxu0 0
      %271 = vmatpush1.bf16.msra.mxu0 0
      %272 = vmatprep.subr.bf16.mxu0 0
      %273 = vmatpush1.bf16.msra.mxu0 0
      %274 = vmatprep.subr.bf16.mxu0 0
      %275 = vmatpush1.bf16.msra.mxu0 0
      %276 = vmatprep.subr.bf16.mxu0 0
      %277 = vmatpush1.bf16.msra.mxu0 0
      %278 = vmatprep.subr.bf16.mxu0 0
      %279 = vmatpush1.bf16.msra.mxu0 0
      %280 = vmatprep.subr.bf16.mxu0 0
      %281 = vmatpush1.bf16.msra.mxu0 0
      %282 = vmatprep.mubr.bf16.mxu0 0
      %283 = vmatmul.mubr.bf16.gmra.mrb[0].mxu0 %v242
      %v284 = vpop.f32.mrb[0].mxu0
      %v285 = vadd.f32 %v235, %v284
      %v286 = vpop.f32.mrb[0].mxu0
      %v287 = vadd.f32 %v237, %v286
      %v288 = vpop.f32.mrb[0].mxu0
      %v289 = vpop.f32.mrb[0].mxu0
      %290 = vdwg.mxu0
      %s291 = scalar_lea.vmem %s1, 4
      %v292 = vld [vmem:[%s291] sm:$0x3]
      %293 = vrot.lane.b32.xlu0 %v181, 119
      %v294 = vpop.permute.xlu0 %293
      %295 = vrot.lane.b32.xlu0 %v182, 119
      %v296 = vpop.permute.xlu0 %295
      %vm297 = vcmask 973824
      %v298 = vsel %vm297, %v294, %v296
      %v300 = vsel %vm189, %v292, 0
      %v303 = vsel %vm193, %v298, 0
      %v306 = vsel %vm193, %v296, 0
      %308 = vmatprep.subr.bf16.mxu0 %v306
      %309 = vmatpush1.bf16.msra.mxu0 %v303
      %310 = vmatprep.subr.bf16.mxu0 0
      %311 = vmatpush1.bf16.msra.mxu0 0
      %312 = vmatprep.subr.bf16.mxu0 0
      %313 = vmatpush1.bf16.msra.mxu0 0
      %314 = vmatprep.subr.bf16.mxu0 0
      %315 = vmatpush1.bf16.msra.mxu0 0
      %316 = vmatprep.subr.bf16.mxu0 0
      %317 = vmatpush1.bf16.msra.mxu0 0
      %318 = vmatprep.subr.bf16.mxu0 0
      %319 = vmatpush1.bf16.msra.mxu0 0
      %320 = vmatprep.subr.bf16.mxu0 0
      %321 = vmatpush1.bf16.msra.mxu0 0
      %322 = vmatprep.subr.bf16.mxu0 0
      %323 = vmatpush1.bf16.msra.mxu0 0
      %324 = vmatprep.subr.bf16.mxu0 0
      %325 = vmatpush1.bf16.msra.mxu0 0
      %326 = vmatprep.subr.bf16.mxu0 0
      %327 = vmatpush1.bf16.msra.mxu0 0
      %328 = vmatprep.subr.bf16.mxu0 0
      %329 = vmatpush1.bf16.msra.mxu0 0
      %330 = vmatprep.subr.bf16.mxu0 0
      %331 = vmatpush1.bf16.msra.mxu0 0
      %332 = vmatprep.subr.bf16.mxu0 0
      %333 = vmatpush1.bf16.msra.mxu0 0
      %334 = vmatprep.subr.bf16.mxu0 0
      %335 = vmatpush1.bf16.msra.mxu0 0
      %336 = vmatprep.subr.bf16.mxu0 0
      %337 = vmatpush1.bf16.msra.mxu0 0
      %338 = vmatprep.subr.bf16.mxu0 0
      %339 = vmatpush1.bf16.msra.mxu0 0
      %340 = vmatprep.mubr.bf16.mxu0 0
      %341 = vmatmul.mubr.bf16.gmra.mrb[0].mxu0 %v300
      %v342 = vpop.f32.mrb[0].mxu0
      %v343 = vadd.f32 0.0, %v342
      %v344 = vpop.f32.mrb[0].mxu0
      %v345 = vadd.f32 0.0, %v344
      %v346 = vpop.f32.mrb[0].mxu0
      %v347 = vpop.f32.mrb[0].mxu0
      %348 = vdwg.mxu0
      %v349 = vadd.f32 %v285, %v343
      %v350 = vadd.f32 %v287, %v345
      %s351 = scalar_lea.vmem %s1, 6
      %v352 = vld [vmem:[%s351] sm:$0x3]
      %353 = vrot.lane.b32.xlu0 %v181, 118
      %v354 = vpop.permute.xlu0 %353
      %355 = vrot.lane.b32.xlu0 %v182, 118
      %v356 = vpop.permute.xlu0 %355
      %vm357 = vcmask 965632
      %v358 = vsel %vm357, %v354, %v356
      %v360 = vsel %vm189, %v352, 0
      %v363 = vsel %vm193, %v358, 0
      %v366 = vsel %vm193, %v356, 0
      %368 = vmatprep.subr.bf16.mxu0 %v366
      %369 = vmatpush1.bf16.msra.mxu0 %v363
      %370 = vmatprep.subr.bf16.mxu0 0
      %371 = vmatpush1.bf16.msra.mxu0 0
      %372 = vmatprep.subr.bf16.mxu0 0
      %373 = vmatpush1.bf16.msra.mxu0 0
      %374 = vmatprep.subr.bf16.mxu0 0
      %375 = vmatpush1.bf16.msra.mxu0 0
      %376 = vmatprep.subr.bf16.mxu0 0
      %377 = vmatpush1.bf16.msra.mxu0 0
      %378 = vmatprep.subr.bf16.mxu0 0
      %379 = vmatpush1.bf16.msra.mxu0 0
      %380 = vmatprep.subr.bf16.mxu0 0
      %381 = vmatpush1.bf16.msra.mxu0 0
      %382 = vmatprep.subr.bf16.mxu0 0
      %383 = vmatpush1.bf16.msra.mxu0 0
      %384 = vmatprep.subr.bf16.mxu0 0
      %385 = vmatpush1.bf16.msra.mxu0 0
      %386 = vmatprep.subr.bf16.mxu0 0
      %387 = vmatpush1.bf16.msra.mxu0 0
      %388 = vmatprep.subr.bf16.mxu0 0
      %389 = vmatpush1.bf16.msra.mxu0 0
      %390 = vmatprep.subr.bf16.mxu0 0
      %391 = vmatpush1.bf16.msra.mxu0 0
      %392 = vmatprep.subr.bf16.mxu0 0
      %393 = vmatpush1.bf16.msra.mxu0 0
      %394 = vmatprep.subr.bf16.mxu0 0
      %395 = vmatpush1.bf16.msra.mxu0 0
      %396 = vmatprep.subr.bf16.mxu0 0
      %397 = vmatpush1.bf16.msra.mxu0 0
      %398 = vmatprep.subr.bf16.mxu0 0
      %399 = vmatpush1.bf16.msra.mxu0 0
      %400 = vmatprep.mubr.bf16.mxu0 0
      %401 = vmatmul.mubr.bf16.gmra.mrb[0].mxu0 %v360
      %v402 = vpop.f32.mrb[0].mxu0
      %v403 = vadd.f32 0.0, %v402
      %v404 = vpop.f32.mrb[0].mxu0
      %v405 = vadd.f32 0.0, %v404
      %v406 = vpop.f32.mrb[0].mxu0
      %v407 = vpop.f32.mrb[0].mxu0
      %408 = vdwg.mxu0
      %v409 = vadd.f32 %v349, %v403
      %v410 = vadd.f32 %v350, %v405
      %v411 = vld [vmem:[%s2] sm:$0x7]
      %413 = vset.pattern.permute.xlu0 0
      %414 = vperm.xlu0 %413, %v411
      %v415 = vpop.permute.xlu0 %414
      %v417 = vadd.f32 %v409, %v415
      %v418 = vadd.f32 %v410, %v415
      %v419 = vmax.f32 %v417, 0.0
      %v420 = vmax.f32 %v418, 0.0
      %423 = vrot.lane.b32.xlu0 %v419, 127
      %v424 = vpop.permute.xlu0 %423
      %425 = vrot.lane.b32.xlu0 %v420, 127
      %v426 = vpop.permute.xlu0 %425
      %vm427 = vcmask 1039360
      %v428 = vsel %vm427, %v424, %v426
      %v431 = vmax.f32 %v419, %v428
      %v432 = vmax.f32 %v420, %v426
      %435 = vrot.lane.b32.xlu0 %v431, 119
      %v436 = vpop.permute.xlu0 %435
      %437 = vrot.lane.b32.xlu0 %v432, 119
      %v438 = vpop.permute.xlu0 %437
      %vm439 = vcmask 973824
      %v440 = vsel %vm439, %v436, %v438
      %v442 = vmax.f32 %v431, %v440
      %v443 = vpack.c.bf16 %v442, %v442
      %vm444 = vcmask 1041408
      %vm445 = vsmask.f32 1280
      %vm446 = vmand %vm444, %vm445
      %v447 = vld [vmem:[%s168] sm:$0x3]
      %v448 = vsel %vm446, %v443, %v447
      %449 = vst [vmem:[%s168] sm:$0x3] %v448
      %p450 = scmp.lt.s32.totalorder %s14, 1
      %s451 = scalar_select %p450, %s14, 1
      %s452 = smul.addr %s451, 2
      %s453 = scalar_lea.vmem %s3, %s452
      // Predicated region
      $region33: #{convnet_forward.3} parent=31 // pred_check
        %p454 = pneg %p100
      $region34: #{convnet_forward.3} parent=31 // pred_check_branch
        %456 = sbr.rel (%p454) target = $region36
      $region35: #{convnet_forward.3} parent=31 // pred_region
        _
      $region36: #{convnet_forward.3} parent=31 // pred_fallthru
        _
    $region32: #{convnet_forward.3} parent=5 // pred_fallthru
      _
    %p457 = scmp.le.s32.totalorder 2, %s9
    // Predicated region
    $region37: #{convnet_forward.3} parent=5 // pred_check
      %p458 = pneg %p457
    $region38: #{convnet_forward.3} parent=5 // pred_check_branch
      %460 = sbr.rel (%p458) target = $region40
    $region39: #{convnet_forward.3} parent=5 // pred_region
      %s461 = ssub.s32 %s9, 2
      // Predicated region
      $region41: #{convnet_forward.3} parent=39 // pred_check
        %p462 = pneg %p106
      $region42: #{convnet_forward.3} parent=39 // pred_check_branch
        %464 = sbr.rel (%p462) target = $region44
      $region43: #{convnet_forward.3} parent=39 // pred_region
        %p465 = scmp.lt.s32.totalorder %s15, 1
        %s466 = scalar_select %p465, %s15, 1
        %s467 = smul.addr %s466, 2
        %s468 = scalar_lea.vmem %s3, %s467
      $region44: #{convnet_forward.3} parent=39 // pred_fallthru
        _
    $region40: #{convnet_forward.3} parent=5 // pred_fallthru
      _
  $region6: #{convnet_forward.3} parent=0 // loop_footer
    %s13 = sadd.s32 1, %s9
  $region7: #{convnet_forward.3} parent=0 // loop_footer_branch
    %8 = sbr.rel target = $region3
  $region8: #{convnet_forward.3} parent=0 // loop_exit
    _

</llo_original>
